<compile_context>
chip_gen: v7x
topology: tpu7x:2x2x1
jax: 0.10.0
libtpu: 0.0.40
codegen_flags: <defaults>
</compile_context>

<pallas_src>
import math
from functools import partial

import jax
import jax.numpy as jnp
from jax.experimental import pallas as pl
from jax.experimental.pallas import tpu as pltpu


def _posemb_kernel(x_ref, tab_ref, o_ref, *, factor: float):
    # x_ref:   (tn, 1)  flattened positions for this row tile
    # tab_ref: (2, C)   row 0 = per-column frequency (final column order),
    #                   row 1 = per-column phase offset (pi/2 -> cos, 0 -> sin)
    # o_ref:   (tn, C)  lane-dense output slab
    xs = x_ref[...].astype(jnp.float32) * jnp.float32(factor)      # (tn, 1)
    freqs = tab_ref[0:1, :]                                         # (1, C)
    phase0 = tab_ref[1:2, :]                                        # (1, C)
    o_ref[...] = jnp.sin(xs * freqs + phase0).astype(o_ref.dtype)   # (tn, C)


def _round_up(v: int, m: int) -> int:
    return ((v + m - 1) // m) * m


def positional_embedding(x, *, num_channels: int, max_positions: int,
                         factor: float, endpoint: bool = False,
                         rearrange: bool = False,
                         out_dtype=jnp.float32,
                         vmem_budget_bytes: int = 8 << 20):
    """Matches PositionalEmbedding.forward. x: any shape; returns (x.size, C)."""
    assert num_channels % 2 == 0
    C = num_channels
    half = C // 2
    assert not (endpoint and half == 1), "endpoint=True with num_channels==2 divides by zero"

    x_flat = x.reshape(-1).astype(jnp.float32)
    n = int(x_flat.shape[0])
    x2d = x_flat.reshape(n, 1)

    # ---- static per-column table (same arange/pow as the reference, f32) ----
    denom = float(half - (1 if endpoint else 0))
    freqs = jnp.arange(half, dtype=jnp.float32) / jnp.float32(denom)
    freqs = jnp.float32(1.0 / max_positions) ** freqs               # (half,)
    half_pi = jnp.full((half,), math.pi / 2.0, dtype=jnp.float32)
    zeros = jnp.zeros((half,), dtype=jnp.float32)
    if rearrange:
        # 'b (f c) -> b (c f)', f=2  ->  column 2c = cos_c, column 2c+1 = sin_c
        f_row = jnp.stack([freqs, freqs], axis=1).reshape(C)
        p_row = jnp.stack([half_pi, zeros], axis=1).reshape(C)
    else:
        # plain concat: first half cos, second half sin
        f_row = jnp.concatenate([freqs, freqs])
        p_row = jnp.concatenate([half_pi, zeros])
    tab = jnp.stack([f_row, p_row], axis=0)                          # (2, C)

    # ---- row tile from a VMEM budget (double-buffered output slab) ----------
    budget = int(vmem_budget_bytes)
    try:
        # Cap against the chip's VMEM (v7x: 64 MiB physical vs 128 MiB on
        # v5e/v6e) so large C never OOMs a smaller-VMEM generation.
        cap = int(pltpu.get_tpu_info().vmem_capacity_bytes)
        budget = min(budget, cap // 8)
    except Exception:
        pass
    tn = budget // (2 * C * 4)                 # 2 output buffers, f32 compute
    tn = max(8, (tn // 8) * 8)
    tn = min(tn, _round_up(n, 8))              # never bigger than the data
    if n > 8:
        # >= 2 grid steps so both v7x TensorCores get work (cheap elsewhere).
        tn = min(tn, _round_up(pl.cdiv(n, 2), 8))
    grid = (pl.cdiv(n, tn),)

    kernel = partial(_posemb_kernel, factor=float(factor))
    out_itemsize = jnp.dtype(out_dtype).itemsize
    cost = pl.CostEstimate(
        flops=3 * n * C,
        transcendentals=n * C,
        bytes_accessed=n * 4 + 2 * C * 4 + n * C * out_itemsize,
    )

    out = pl.pallas_call(
        kernel,
        out_shape=jax.ShapeDtypeStruct((n, C), out_dtype),
        grid_spec=pltpu.PrefetchScalarGridSpec(
            num_scalar_prefetch=0,
            grid=grid,
            in_specs=[
                pl.BlockSpec((tn, 1), lambda i: (i, 0)),   # positions column
                pl.BlockSpec((2, C), lambda i: (0, 0)),    # freq/phase table
            ],
            out_specs=pl.BlockSpec((tn, C), lambda i: (i, 0)),
        ),
        compiler_params=pltpu.CompilerParams(
            dimension_semantics=("parallel",)),
        cost_estimate=cost,
    )(x2d, tab)

    return out


def _reference(x, num_channels, max_positions, factor, endpoint=False,
               rearrange=False):
    xf = x.reshape(-1).astype(jnp.float32) * factor
    half = num_channels // 2
    freqs = jnp.arange(half, dtype=jnp.float32) / jnp.float32(
        half - (1 if endpoint else 0))
    freqs = jnp.float32(1.0 / max_positions) ** freqs
    ger = xf[:, None] * freqs[None, :]
    out = jnp.concatenate([jnp.cos(ger), jnp.sin(ger)], axis=1)
    if rearrange:
        out = out.reshape(-1, 2, half)
        out = jnp.transpose(out, (0, 2, 1)).reshape(-1, num_channels)
    return out


if __name__ == "__main__":
    key = jax.random.PRNGKey(0)
    batch, seq = 2, 8                 # x: (2, 8) -> 16 flattened positions
    num_channels = 128
    max_positions = 10000
    factor = 100.0

    x = jax.random.uniform(key, (batch, seq), dtype=jnp.float32)

    out = positional_embedding(x, num_channels=num_channels,
                               max_positions=max_positions, factor=factor,
                               endpoint=False, rearrange=False)
    out = jax.block_until_ready(out)
    ref = _reference(x, num_channels, max_positions, factor, False, False)
    assert out.shape == (batch * seq, num_channels)
    assert jnp.allclose(out, ref, atol=1e-4, rtol=1e-4), "mismatch (concat path)"

    out_r = positional_embedding(x, num_channels=num_channels,
                                 max_positions=max_positions, factor=factor,
                                 endpoint=False, rearrange=True)
    out_r = jax.block_until_ready(out_r)
    ref_r = _reference(x, num_channels, max_positions, factor, False, True)
    assert jnp.allclose(out_r, ref_r, atol=1e-4, rtol=1e-4), "mismatch (rearrange path)"

    # Non-tile-divisible row count exercises the ragged-last-block path.
    x_odd = jax.random.uniform(jax.random.PRNGKey(1), (3, 7), dtype=jnp.float32)
    out_o = positional_embedding(x_odd, num_channels=num_channels,
                                 max_positions=max_positions, factor=factor,
                                 endpoint=False, rearrange=False)
    out_o = jax.block_until_ready(out_o)
    ref_o = _reference(x_odd, num_channels, max_positions, factor, False, False)
    assert out_o.shape == (21, num_channels)
    assert jnp.allclose(out_o, ref_o, atol=1e-4, rtol=1e-4), "mismatch (ragged path)"

    print("KERNEL_OK")
</pallas_src>

<mosaic_0001>
module attributes {stable_mosaic.version = 11 : i64} {
  func.func @_posemb_kernel(%arg0: i32, %arg1: memref<8x1xf32, #tpu.memory_space<vmem>>, %arg2: memref<2x128xf32, #tpu.memory_space<vmem>>, %arg3: memref<8x128xf32, #tpu.memory_space<vmem>>) attributes {dimension_semantics = [#tpu.dimension_semantics<parallel>], iteration_bounds = array<i64: 2>, scalar_prefetch = 0 : i64, scratch_operands = 0 : i64, tpu.core_type = #tpu.core_type<tc>, window_params = [{transform_indices = @transform_0, window_bounds = array<i64: 8, 1>}, {pipeline_mode = #tpu.pipeline_mode<synchronous>, transform_indices = @transform_1, window_bounds = array<i64: 2, 128>}, {transform_indices = @transform_2, window_bounds = array<i64: 8, 128>}]} {
    %c0 = arith.constant 0 : index
    %c0_0 = arith.constant 0 : index
    %0 = vector.load %arg1[%c0, %c0_0] : memref<8x1xf32, #tpu.memory_space<vmem>>, vector<8x1xf32>
    %cst = arith.constant 1.000000e+02 : f32
    %1 = vector.broadcast %cst : f32 to vector<8x1xf32>
    %2 = arith.mulf %0, %1 : vector<8x1xf32>
    %c0_1 = arith.constant 0 : index
    %c0_2 = arith.constant 0 : index
    %3 = vector.load %arg2[%c0_1, %c0_2] : memref<2x128xf32, #tpu.memory_space<vmem>>, vector<1x128xf32>
    %c1 = arith.constant 1 : index
    %c0_3 = arith.constant 0 : index
    %4 = vector.load %arg2[%c1, %c0_3] : memref<2x128xf32, #tpu.memory_space<vmem>>, vector<1x128xf32>
    %5 = vector.broadcast %2 : vector<8x1xf32> to vector<8x128xf32>
    %6 = vector.broadcast %3 : vector<1x128xf32> to vector<8x128xf32>
    %7 = arith.mulf %5, %6 : vector<8x128xf32>
    %8 = vector.broadcast %4 : vector<1x128xf32> to vector<8x128xf32>
    %9 = arith.addf %7, %8 : vector<8x128xf32>
    %10 = math.sin %9 : vector<8x128xf32>
    %c0_4 = arith.constant 0 : index
    %c0_5 = arith.constant 0 : index
    %11 = vector.load %arg3[%c0_4, %c0_5] : memref<8x128xf32, #tpu.memory_space<vmem>>, vector<8x128xf32>
    tpu.vector_store %arg3[%c0_4, %c0_5], %10 {strides = array<i32>} : memref<8x128xf32, #tpu.memory_space<vmem>>, vector<8x128xf32>,
    return
  }
  func.func @transform_0(%arg0: i32) -> (i32, i32) {
    %c0_i32 = arith.constant 0 : i32
    %c0_i32_0 = arith.constant 0 : i32
    return %arg0, %c0_i32 : i32, i32
  }
  func.func @transform_1(%arg0: i32) -> (i32, i32) {
    %c0_i32 = arith.constant 0 : i32
    %c0_i32_0 = arith.constant 0 : i32
    %c0_i32_1 = arith.constant 0 : i32
    return %c0_i32, %c0_i32_0 : i32, i32
  }
  func.func @transform_2(%arg0: i32) -> (i32, i32) {
    %c0_i32 = arith.constant 0 : i32
    %c0_i32_0 = arith.constant 0 : i32
    return %arg0, %c0_i32 : i32, i32
  }
}

</mosaic_0001>

<llo_original>
// kernel: tpu_custom_call.1
$region0: #{tpu_custom_call.1}
  #allocation0 [shape = 'u32[]', space=smem, size = 0x4, offset = 0x4, fixed_abs, tag = 'smem constant byte address 0x4 - core index']
  #allocation1 [shape = 'u32[144,128]{1,0:T(1,128)}', space=vmem, size = 0x12000, scoped, tag = 'internal scratch']
  %s0 = inlined_call_operand.vmem [shape: f32[16,1], index: 0, kind: input, shape index: {}]
  %s1 = inlined_call_operand.vmem [shape: f32[2,128], index: 1, kind: input, shape index: {}]
  %s2 = inlined_call_operand.hbm [shape: f32[16,128], index: 2, kind: output, shape index: {}]
  %s3 = sld [smem:[#allocation0]]
  $region41: #{tpu_custom_call.1} parent=0
    _
  %s5 = ssub.s32 1, %s3
  %s6 = scalar_select 0, %s5, %s3
  $region1: #{tpu_custom_call.1} parent=0
    #allocation2 [shape = 'u8[8192]{0}', space=vmem, size = 0x2000, scoped, tag = 'output window, operand 0']
    #allocation3 [shape = 's32[2]{0}', space=sflag, size = 0x8, scoped, tag = 'scoped memory for tpu_custom_call.1']
    %7 = vsyncpa [#allocation3], 0
    %s8 = scalar_lea.sflag [#allocation3], 1
    %9 = vsyncpa %s8, 0
    loop: start=0, step=1, limit=4
    $region2: #{tpu_custom_call.1} parent=1 // loop_pre_header
      _
    $region3: #{tpu_custom_call.1} parent=1 // loop_header
      %s11 = sphi 0, %s15
      %p12 = scmp.ge.s32.totalorder %s11, 4
      %s21 = sphi 0, %s23
      %s24 = sphi 0, %s21
      %s25 = sphi 0, %s24
      %s41 = sphi 0, %s25
      %s45 = sphi 0, %s45
      %s47 = sphi 0, %s45
      %s48 = sphi 0, %s47
      %s62 = sphi 0, %s48
      %s68 = sphi 0, %s70
      %s71 = sphi 0, %s68
      %s72 = sphi 0, %s71
      %s88 = sphi 0, %s72
    $region4: #{tpu_custom_call.1} parent=1 // loop_header_branch
      %14 = sbr.rel (%p12) target = $region8
    $region5: #{tpu_custom_call.1} parent=1 // loop_body
      %s16 = ssub.s32 %s11, 1
      %s17 = ssub.s32 %s11, 2
      %s18 = sadd.s32 %s11, 1
      %s19 = ssub.s32 %s11, %s18
      %p20 = scmp.eq.s32.totalorder %s19, 0
      %s22 = sadd.s32 %s21, 1
      %s23 = scalar_select %p20, %s21, %s22
      %p26 = pneg %p20
      %p27 = scmp.eq.s32.totalorder %s11, 1
      %p28 = por %p26, %p27
      %p29 = scmp.ne.s32.totalorder %s21, %s24
      %p30 = scmp.eq.s32.totalorder %s11, 0
      %p31 = por %p29, %p30
      %p32 = scmp.ne.s32.totalorder %s21, %s24
      %p33 = scmp.eq.s32.totalorder %s16, 1
      %p34 = por %p32, %p33
      %p35 = scmp.ne.s32.totalorder %s24, %s25
      %p36 = scmp.eq.s32.totalorder %s16, 0
      %p37 = por %p35, %p36
      %p38 = scmp.ne.s32.totalorder %s24, %s25
      %p39 = scmp.eq.s32.totalorder %s17, 1
      %p40 = por %p38, %p39
      %p42 = scmp.ne.s32.totalorder %s25, %s41
      %p43 = scmp.eq.s32.totalorder %s17, 0
      %p44 = por %p42, %p43
      %s46 = sadd.s32 %s45, 1
      %p49 = scmp.eq.s32.totalorder %s11, 1
      %p50 = scmp.ne.s32.totalorder %s45, %s47
      %p51 = scmp.eq.s32.totalorder %s11, 0
      %p52 = por %p50, %p51
      %p53 = scmp.ne.s32.totalorder %s45, %s47
      %p54 = scmp.eq.s32.totalorder %s16, 1
      %p55 = por %p53, %p54
      %p56 = scmp.ne.s32.totalorder %s47, %s48
      %p57 = scmp.eq.s32.totalorder %s16, 0
      %p58 = por %p56, %p57
      %p59 = scmp.ne.s32.totalorder %s47, %s48
      %p60 = scmp.eq.s32.totalorder %s17, 1
      %p61 = por %p59, %p60
      %p63 = scmp.ne.s32.totalorder %s48, %s62
      %p64 = scmp.eq.s32.totalorder %s17, 0
      %p65 = por %p63, %p64
      %s66 = ssub.s32 %s11, %s18
      %p67 = scmp.eq.s32.totalorder %s66, 0
      %s69 = sadd.s32 %s68, 1
      %s70 = scalar_select %p67, %s68, %s69
      %p73 = pneg %p67
      %p74 = scmp.eq.s32.totalorder %s11, 1
      %p75 = por %p73, %p74
      %p76 = scmp.ne.s32.totalorder %s68, %s71
      %p77 = scmp.eq.s32.totalorder %s11, 0
      %p78 = por %p76, %p77
      %p79 = scmp.ne.s32.totalorder %s68, %s71
      %p80 = scmp.eq.s32.totalorder %s16, 1
      %p81 = por %p79, %p80
      %p82 = scmp.ne.s32.totalorder %s71, %s72
      %p83 = scmp.eq.s32.totalorder %s16, 0
      %p84 = por %p82, %p83
      %p85 = scmp.ne.s32.totalorder %s71, %s72
      %p86 = scmp.eq.s32.totalorder %s17, 1
      %p87 = por %p85, %p86
      %p89 = scmp.ne.s32.totalorder %s72, %s88
      %p90 = scmp.eq.s32.totalorder %s17, 0
      %p91 = por %p89, %p90
      %p92 = scmp.le.s32.totalorder 1, %s11
      %p93 = scmp.lt.s32.totalorder %s11, 3
      %p94 = pnand %p92, %p93
      %p95 = pneg %p94
      // Predicated region
      $region9: #{tpu_custom_call.1} parent=5 // pred_check
        _
      $region10: #{tpu_custom_call.1} parent=5 // pred_check_branch
        %97 = sbr.rel (%p94) target = $region12
      $region11: #{tpu_custom_call.1} parent=5 // pred_region
        %s98 = ssub.s32 %s11, 1
        // Predicated region
        $region13: #{tpu_custom_call.1} parent=11 // pred_check
          %p99 = pneg %p58
        $region14: #{tpu_custom_call.1} parent=11 // pred_check_branch
          %101 = sbr.rel (%p99) target = $region16
        $region15: #{tpu_custom_call.1} parent=11 // pred_region
          _
        $region16: #{tpu_custom_call.1} parent=11 // pred_fallthru
          _
      $region12: #{tpu_custom_call.1} parent=5 // pred_fallthru
        _
      %p102 = scmp.lt.s32.totalorder %s11, 2
      // Predicated region
      $region17: #{tpu_custom_call.1} parent=5 // pred_check
        %p103 = pneg %p102
      $region18: #{tpu_custom_call.1} parent=5 // pred_check_branch
        %105 = sbr.rel (%p103) target = $region20
      $region19: #{tpu_custom_call.1} parent=5 // pred_region
        // Predicated region
        $region21: #{tpu_custom_call.1} parent=19 // pred_check
          %p106 = pneg %p31
        $region22: #{tpu_custom_call.1} parent=19 // pred_check_branch
          %108 = sbr.rel (%p106) target = $region24
        $region23: #{tpu_custom_call.1} parent=19 // pred_region
          %p109 = scmp.lt.s32.totalorder %s11, 1
          %s110 = scalar_select %p109, %s11, 1
          %s111 = smul.addr %s110, 8
          %s112 = scalar_lea.vmem %s0, %s111
        $region24: #{tpu_custom_call.1} parent=19 // pred_fallthru
          _
      $region20: #{tpu_custom_call.1} parent=5 // pred_fallthru
        _
      %p113 = scmp.le.s32.totalorder 1, %s11
      %p114 = scmp.lt.s32.totalorder %s11, 3
      %p115 = pnand %p113, %p114
      %p116 = pneg %p115
      // Predicated region
      $region25: #{tpu_custom_call.1} parent=5 // pred_check
        _
      $region26: #{tpu_custom_call.1} parent=5 // pred_check_branch
        %118 = sbr.rel (%p115) target = $region28
      $region27: #{tpu_custom_call.1} parent=5 // pred_region
        %s119 = ssub.s32 %s11, 1
        %p120 = scmp.lt.s32.totalorder %s16, 1
        %s121 = scalar_select %p120, %s16, 1
        %s122 = smul.addr %s121, 8
        %s123 = scalar_lea.vmem %s0, %s122
        %p124 = pneg %p37
        %p125 = pneg %p34
        %p126 = pneg %p58
        %p127 = pneg %p55
        %p128 = pneg %p84
        %p129 = pneg %p81
        %s130 = sand.u32 %s71, 1
        %s131 = scalar_lea.sflag [#allocation3], %s130
        %s132 = sand.u32 %s71, 1
        %s133 = smul.addr %s132, 8
        %s134 = scalar_lea.vmem [#allocation2], %s133
        %p135 = scmp.lt.s32.totalorder %s16, 1
        %s136 = scalar_select %p135, %s16, 1
        %s137 = smul.addr %s136, 8
        %s138 = scalar_lea.vmem %s0, %s137
        %v139 = vld [vmem:[%s138] sm:$0xff]
        %v140 = vmul.f32 %v139, 100.0
        %v141 = vld [vmem:[%s1] sm:$0x1]
        %v142 = vld [vmem:[%s1 + $0x1] sm:$0x1]
        %144 = vset.pattern.permute.xlu0 0
        %145 = vperm.xlu0 %144, %v140
        %v146 = vpop.permute.xlu0 %145
        %v148 = vlaneseq
        %v149 = vshrl.u32 %v148, 7
        %v150 = vsub.s32 0, %v149
        %v151 = vrot.slane %v141, %v150
        %v152 = vmul.f32 %v146, %v151
        %v153 = vlaneseq
        %v154 = vshrl.u32 %v153, 7
        %v155 = vsub.s32 0, %v154
        %v156 = vrot.slane %v142, %v155
        %v157 = vadd.f32 %v152, %v156
        %v158 = vand.u32 2147483647, %v157
        %vm159 = vcmp.le.f32.partialorder %v158, 0.7853982
        %vm160 = vcmp.lt.s32.totalorder %v157, 0
        %v161 = vand.u32 %v157, 2139095040
        %v162 = vshrl.u32 %v161, 23
        %v163 = vsub.s32 %v162, 127
        %v164 = vand.u32 2147483647, %v157
        %v165 = vand.u32 %v164, 8388607
        %v166 = vor.u32 %v165, 8388608
        %v167 = vsub.s32 0, %v166
        %v168 = vadd.s32 %v163, 1
        %vm169 = vcmp.gt.s32.totalorder %v168, 0
        %v170 = vsel %vm169, %v168, 0
        %v171 = vshrl.u32 %v170, 5
        %v172 = vand.u32 %v170, 31
        %v173 = vsub.s32 32, %v172
        %v174 = vshrl.u32 683565275, %v173
        %v175 = vshll.u32 683565275, %v172
        %v176 = vshrl.u32 2475754826, %v173
        %v177 = vor.u32 %v175, %v176
        %v178 = vshll.u32 2475754826, %v172
        %v179 = vshrl.u32 2131351028, %v173
        %v180 = vor.u32 %v178, %v179
        %v181 = vshll.u32 2131351028, %v172
        %v182 = vshrl.u32 2102212464, %v173
        %v183 = vor.u32 %v181, %v182
        %v184 = vshll.u32 2102212464, %v172
        %v185 = vshrl.u32 920167782, %v173
        %v186 = vor.u32 %v184, %v185
        %v187 = vshll.u32 920167782, %v172
        %v188 = vshrl.u32 1326507024, %v173
        %v189 = vor.u32 %v187, %v188
        %vm190 = vcmp.lt.s32.totalorder %v171, 1
        %vm191 = vcmp.lt.s32.totalorder %v171, 2
        %vm192 = vcmp.lt.s32.totalorder %v171, 3
        %vm193 = vcmp.lt.s32.totalorder %v171, 4
        %v194 = vsel %vm190, %v174, %v177
        %v195 = vsel %vm193, %v183, 2102212464
        %v196 = vsel %vm192, %v180, %v195
        %v197 = vsel %vm191, %v194, %v196
        %v198 = vsel %vm190, %v177, %v180
        %v199 = vsel %vm193, %v186, 920167782
        %v200 = vsel %vm192, %v183, %v199
        %v201 = vsel %vm191, %v198, %v200
        %v202 = vsel %vm190, %v180, %v183
        %v203 = vsel %vm193, %v189, 1326507024
        %v204 = vsel %vm192, %v186, %v203
        %v205 = vsel %vm191, %v202, %v204
        %v206 = vshll.u32 %v166, 8
        %v207 = vmul.u32.u64.compose %v206, %v205
        %v208 = vextract.low.u32 %v207
        %v209 = vextract.high.u32 %v207
        %v210 = vmul.u32.u64.compose %v206, %v201
        %v211 = vextract.low.u32 %v210
        %v212 = vextract.high.u32 %v210
        %v213 = vmul.u32 %v206, %v197
        %v214 = vadd.s32 %v209, %v211
        %vm215 = vc.u32 %v209, %v211
        %v216 = vadd.s32 %v212, 1
        %v217 = vsel %vm215, %v216, %v212
        %v218 = vadd.s32 %v213, %v217
        %v219 = vadd.s32 %v218, 536870912
        %v220 = vshrl.u32 %v219, 30
        %v221 = vshll.u32 %v220, 30
        %v222 = vsub.s32 %v218, %v221
        %vm223 = vcmp.lt.s32.totalorder %v222, 0
        %v224 = vsub.s32 0, %v222
        %v225 = vsel %vm223, %v224, %v222
        %v226 = vclz %v225
        %v227 = vsub.s32 %v226, 2
        %vm228 = vcmp.gt.s32.totalorder 0, %v227
        %v229 = vsel %vm228, 0, %v227
        %v230 = vsub.s32 32, %v229
        %v231 = vshll.u32 %v222, %v229
        %v232 = vshrl.u32 %v214, %v230
        %v233 = vor.u32 %v231, %v232
        %v234 = vsub.s32 4294967266, %v229
        %v235 = vadd.s32 %v234, 127
        %v236 = vshll.u32 %v235, 23
        %v237 = vor.u32 4788187, %v236
        %v238 = vand.u32 2147483647, %v237
        %v240 = vcvt.s32.f32 %v233
        %v241 = vmul.f32 %v240, %v238
        %v242 = vxor.u32 %v241, 2147483648
        %v243 = vsel %vm160, %v242, %v241
        %v244 = vsub.s32 4, %v220
        %v245 = vsel %vm160, %v244, %v220
        %v246 = vsel %vm159, %v157, %v243
        %v247 = vsel %vm159, 0, %v245
        %v248 = vcosq.f32.pop %v246
        %v249 = vsinq.f32.pop %v246
        %vm250 = vweird.f32 %v157
        %v251 = vadd.s32 %v247, 3
        %v252 = vand.u32 %v251, 3
        %vm253 = vcmp.lt.s32.totalorder %v252, 2
        %vm254 = vcmp.eq.s32.totalorder %v252, 0
        %v255 = vxor.u32 %v249, 2147483648
        %v256 = vsel %vm254, %v248, %v255
        %vm257 = vcmp.eq.s32.totalorder %v252, 2
        %v258 = vxor.u32 %v248, 2147483648
        %v259 = vsel %vm257, %v258, %v249
        %v260 = vsel %vm253, %v256, %v259
        %v261 = vsel %vm250, nan, %v260
        %262 = vst [vmem:[%s134] sm:$0xff] %v261
        %s263 = sand.u32 %s71, 1
        %s264 = scalar_lea.sflag [#allocation3], %s263
        %s265 = sand.u32 %s71, 1
        %s266 = smul.addr %s265, 8
        %s267 = scalar_lea.vmem [#allocation2], %s266
        // Predicated region
        $region29: #{tpu_custom_call.1} parent=27 // pred_check
          %p268 = pneg %p81
        $region30: #{tpu_custom_call.1} parent=27 // pred_check_branch
          %270 = sbr.rel (%p268) target = $region32
        $region31: #{tpu_custom_call.1} parent=27 // pred_region
          %s272 = ssub.s32 128, 128
          %273 = vsyncadd %s264, %s272
          %s274 = smul.addr %s16, 128
          %s275 = scalar_lea.hbm %s2, %s274
          %s277 = sshll.u32 %s267, 4
          %s278 = int_to_ptr.vmem [resolvable:$true] %s277
          %280 = dma.vmem_to_hbm [thread:$0]  %s278, 128, %s275, %s264
        $region32: #{tpu_custom_call.1} parent=27 // pred_fallthru
          _
      $region28: #{tpu_custom_call.1} parent=5 // pred_fallthru
        _
      %p281 = scmp.le.s32.totalorder 2, %s11
      // Predicated region
      $region33: #{tpu_custom_call.1} parent=5 // pred_check
        %p282 = pneg %p281
      $region34: #{tpu_custom_call.1} parent=5 // pred_check_branch
        %284 = sbr.rel (%p282) target = $region36
      $region35: #{tpu_custom_call.1} parent=5 // pred_region
        %s285 = ssub.s32 %s11, 2
        // Predicated region
        $region37: #{tpu_custom_call.1} parent=35 // pred_check
          %p286 = pneg %p87
        $region38: #{tpu_custom_call.1} parent=35 // pred_check_branch
          %288 = sbr.rel (%p286) target = $region40
        $region39: #{tpu_custom_call.1} parent=35 // pred_region
          %s289 = sand.u32 %s72, 1
          %s290 = scalar_lea.sflag [#allocation3], %s289
          %s291 = sand.u32 %s72, 1
          %s292 = smul.addr %s291, 8
          %s293 = scalar_lea.vmem [#allocation2], %s292
          %294 = dma.done %s290, 128
        $region40: #{tpu_custom_call.1} parent=35 // pred_fallthru
          _
      $region36: #{tpu_custom_call.1} parent=5 // pred_fallthru
        _
    $region6: #{tpu_custom_call.1} parent=1 // loop_footer
      %s15 = sadd.s32 1, %s11
    $region7: #{tpu_custom_call.1} parent=1 // loop_footer_branch
      %10 = sbr.rel target = $region3
    $region8: #{tpu_custom_call.1} parent=1 // loop_exit
      _
    %295 = vsyncpa [#allocation3], 1
    %s296 = scalar_lea.sflag [#allocation3], 1
    %297 = vsyncpa %s296, 1

</llo_original>
